<compile_context>
chip_gen: v7x
topology: tpu7x:2x2x1
jax: 0.10.0
libtpu: 0.0.40
codegen_flags: <defaults>
</compile_context>

<pallas_src>
import jax
import jax.numpy as jnp
from jax.experimental import pallas as pl
from jax.experimental.pallas import tpu as pltpu

INPUT_DIM = 2
HIDDEN = 3
EMBED = 2
NUM_CLASSES = 2
BN_EPS = 1e-5

PAD = 128          # lane (feature) padding
KPAD = 8           # sublane rows reserved per weight block in the param slab
NEG_BIG = -1e30    # baked-in logit mask for padded class columns


# --------------------------------------------------------------------------
# Kernel
# --------------------------------------------------------------------------
def _gaussian_kernel(x_ref, p_ref, out_ref):
    x = x_ref[...]                                    # (B, INPUT_DIM) f32
    inv_b = 1.0 / x.shape[0]                          # static

    # Parameter rows: each slice is (1, PAD), broadcast over sublanes.
    w1 = [p_ref[k:k + 1, :] for k in range(INPUT_DIM)]              # rows 0..1
    w2 = [p_ref[KPAD + k:KPAD + k + 1, :] for k in range(HIDDEN)]   # rows 8..10
    w3 = [p_ref[2 * KPAD + k:2 * KPAD + k + 1, :] for k in range(EMBED)]
    r = 3 * KPAD
    b1 = p_ref[r + 0:r + 1, :]
    g1 = p_ref[r + 1:r + 2, :]
    be1 = p_ref[r + 2:r + 3, :]
    b2 = p_ref[r + 3:r + 4, :]
    g2 = p_ref[r + 4:r + 5, :]
    be2 = p_ref[r + 5:r + 6, :]
    b3m = p_ref[r + 6:r + 7, :]      # class bias, NEG_BIG in padded columns

    def bn_relu(h, g, b):
        # Training-mode BatchNorm1d, single-pass stats (biased variance).
        s1 = jnp.sum(h, axis=0, keepdims=True)
        s2 = jnp.sum(h * h, axis=0, keepdims=True)
        mu = s1 * inv_b
        var = s2 * inv_b - mu * mu
        hn = (h - mu) * jax.lax.rsqrt(var + BN_EPS) * g + b
        return jnp.maximum(hn, 0.0)

    # ---- Linear(2, 3) as VPU broadcast-FMA (K=2) + BN + ReLU --------------
    h1 = x[:, 0:1] * w1[0] + x[:, 1:2] * w1[1] + b1
    h1 = bn_relu(h1, g1, be1)                 # (B, PAD), padded lanes are 0

    # ---- Linear(3, 2) (K=3) + BN + ReLU ------------------------------------
    h2 = (h1[:, 0:1] * w2[0] + h1[:, 1:2] * w2[1]
          + h1[:, 2:3] * w2[2] + b2)
    z = bn_relu(h2, g2, be2)                  # (B, PAD), padded lanes are 0

    # ---- class head + softmax / log-softmax (mask baked into b3m) ----------
    logits = z[:, 0:1] * w3[0] + z[:, 1:2] * w3[1] + b3m
    m = jnp.max(logits, axis=1, keepdims=True)
    shifted = logits - m
    e = jnp.exp(shifted)                      # padded lanes underflow to 0
    s = jnp.sum(e, axis=1, keepdims=True)
    ls = shifted - jnp.log(s)
    prob = e * pl.reciprocal(s, approx=True)  # EUP slot, ~free in-kernel

    # ---- combined (B, PAD) output slab --------------------------------------
    # log_softmax -> lanes [0:2], z -> lanes [2:4], prob -> lanes [4:6].
    # z / prob padded lanes are exactly 0, so a lane roll + add composes them.
    lane = jax.lax.broadcasted_iota(jnp.int32, ls.shape, 1)
    ls_m = jnp.where(lane < NUM_CLASSES, ls, 0.0)   # zero the -1e30 pad lanes
    out_ref[...] = (ls_m
                    + pltpu.roll(z, shift=NUM_CLASSES, axis=1)
                    + pltpu.roll(prob, shift=NUM_CLASSES + EMBED, axis=1))


# --------------------------------------------------------------------------
# Parameter init / one-time packing
# --------------------------------------------------------------------------
def init_params(key):
    """PyTorch-default-style init (uniform(-1/sqrt(fan_in), 1/sqrt(fan_in)))."""
    ks = jax.random.split(key, 6)

    def linear(kw, kb, fan_in, fan_out):
        bound = 1.0 / jnp.sqrt(fan_in)
        w = jax.random.uniform(kw, (fan_in, fan_out), jnp.float32, -bound, bound)
        b = jax.random.uniform(kb, (fan_out,), jnp.float32, -bound, bound)
        return w, b

    w1, b1 = linear(ks[0], ks[1], INPUT_DIM, HIDDEN)
    w2, b2 = linear(ks[2], ks[3], HIDDEN, EMBED)
    w3, b3 = linear(ks[4], ks[5], EMBED, NUM_CLASSES)
    return dict(w1=w1, b1=b1,
                g1=jnp.ones((HIDDEN,), jnp.float32),
                be1=jnp.zeros((HIDDEN,), jnp.float32),
                w2=w2, b2=b2,
                g2=jnp.ones((EMBED,), jnp.float32),
                be2=jnp.zeros((EMBED,), jnp.float32),
                w3=w3, b3=b3)


def pack_params(p):
    """Pack all 10 small parameters into ONE (32, 128) slab (call once).

    Rows [0:8)=w1, [8:16)=w2, [16:24)=w3 (K rows, N padded to 128 lanes);
    rows 24..30 = b1,g1,be1,b2,g2,be2,b3(masked).  Padded columns of every
    gamma/beta/bias row MUST stay zero so BN of padded lanes stays exactly 0
    (rsqrt(eps)~316 would otherwise amplify garbage); the slab is zero-init,
    which guarantees this.  Row 30 (class bias) carries NEG_BIG in padded
    class columns so the softmax/log-softmax mask is baked in.
    """
    slab = jnp.zeros((4 * KPAD, PAD), jnp.float32)
    slab = slab.at[0:INPUT_DIM, 0:HIDDEN].set(p["w1"].astype(jnp.float32))
    slab = slab.at[KPAD:KPAD + HIDDEN, 0:EMBED].set(p["w2"].astype(jnp.float32))
    slab = slab.at[2 * KPAD:2 * KPAD + EMBED,
                   0:NUM_CLASSES].set(p["w3"].astype(jnp.float32))
    r = 3 * KPAD
    slab = slab.at[r + 0, 0:HIDDEN].set(p["b1"].astype(jnp.float32))
    slab = slab.at[r + 1, 0:HIDDEN].set(p["g1"].astype(jnp.float32))
    slab = slab.at[r + 2, 0:HIDDEN].set(p["be1"].astype(jnp.float32))
    slab = slab.at[r + 3, 0:EMBED].set(p["b2"].astype(jnp.float32))
    slab = slab.at[r + 4, 0:EMBED].set(p["g2"].astype(jnp.float32))
    slab = slab.at[r + 5, 0:EMBED].set(p["be2"].astype(jnp.float32))
    slab = slab.at[r + 6, :].set(jnp.full((PAD,), NEG_BIG, jnp.float32))
    slab = slab.at[r + 6, 0:NUM_CLASSES].set(p["b3"].astype(jnp.float32))
    return slab


# --------------------------------------------------------------------------
# Forward wrapper
# --------------------------------------------------------------------------
@jax.jit
def gaussian_net_forward(x, param_slab):
    """x: (B, INPUT_DIM) float32. Returns (log_softmax, z, prob)."""
    B = x.shape[0]
    out = pl.pallas_call(
        _gaussian_kernel,
        grid=(1,),
        in_specs=[
            pl.BlockSpec((B, INPUT_DIM), lambda i: (0, 0)),   # raw x, no pre-pad
            pl.BlockSpec((4 * KPAD, PAD), lambda i: (0, 0)),  # single param slab
        ],
        out_specs=pl.BlockSpec((B, PAD), lambda i: (0, 0)),   # single output slab
        out_shape=jax.ShapeDtypeStruct((B, PAD), jnp.float32),
        compiler_params=pltpu.CompilerParams(
            dimension_semantics=("arbitrary",)),
    )(x.astype(jnp.float32), param_slab)

    ls = out[:, 0:NUM_CLASSES]
    z = out[:, NUM_CLASSES:NUM_CLASSES + EMBED]
    prob = out[:, NUM_CLASSES + EMBED:NUM_CLASSES + EMBED + NUM_CLASSES]
    return ls, z, prob


# --------------------------------------------------------------------------
# Pure-JAX reference (mirrors the PyTorch module in training mode)
# --------------------------------------------------------------------------
def _reference_forward(x, p):
    def bn(h, g, b):
        mu = jnp.mean(h, axis=0, keepdims=True)
        var = jnp.mean((h - mu) ** 2, axis=0, keepdims=True)
        return (h - mu) / jnp.sqrt(var + BN_EPS) * g + b

    h = jnp.maximum(bn(x @ p["w1"] + p["b1"], p["g1"], p["be1"]), 0.0)
    z = jnp.maximum(bn(h @ p["w2"] + p["b2"], p["g2"], p["be2"]), 0.0)
    logits = z @ p["w3"] + p["b3"]
    return jax.nn.log_softmax(logits, axis=1), z, jax.nn.softmax(logits, axis=1)


if __name__ == "__main__":
    key = jax.random.PRNGKey(0)
    kx, kp = jax.random.split(key)

    B = 8
    x = jax.random.normal(kx, (B, INPUT_DIM), jnp.float32)
    params = init_params(kp)
    param_slab = pack_params(params)               # pad/pack once, reuse

    ls, z, prob = jax.block_until_ready(gaussian_net_forward(x, param_slab))

    ls_r, z_r, prob_r = _reference_forward(x, params)
    assert jnp.allclose(ls, ls_r, atol=1e-4, rtol=1e-4), (ls, ls_r)
    assert jnp.allclose(z, z_r, atol=1e-4, rtol=1e-4), (z, z_r)
    # prob uses the EUP approximate reciprocal (pl.reciprocal(approx=True));
    # compare with a correspondingly looser tolerance.
    assert jnp.allclose(prob, prob_r, atol=1e-2, rtol=1e-2), (prob, prob_r)

    print("KERNEL_OK")
</pallas_src>

<mosaic_0001>
module attributes {stable_mosaic.version = 11 : i64} {
  func.func @_gaussian_kernel(%arg0: i32, %arg1: memref<8x2xf32, #tpu.memory_space<vmem>>, %arg2: memref<32x128xf32, #tpu.memory_space<vmem>>, %arg3: memref<8x128xf32, #tpu.memory_space<vmem>>) attributes {dimension_semantics = [#tpu.dimension_semantics<arbitrary>], iteration_bounds = array<i64: 1>, scalar_prefetch = 0 : i64, scratch_operands = 0 : i64, tpu.core_type = #tpu.core_type<tc>, window_params = [{pipeline_mode = #tpu.pipeline_mode<synchronous>, transform_indices = @transform_0, window_bounds = array<i64: 8, 2>}, {pipeline_mode = #tpu.pipeline_mode<synchronous>, transform_indices = @transform_1, window_bounds = array<i64: 32, 128>}, {pipeline_mode = #tpu.pipeline_mode<synchronous>, transform_indices = @transform_2, window_bounds = array<i64: 8, 128>}]} {
    %c0 = arith.constant 0 : index
    %c0_0 = arith.constant 0 : index
    %0 = vector.load %arg1[%c0, %c0_0] : memref<8x2xf32, #tpu.memory_space<vmem>>, vector<8x2xf32>
    %c0_1 = arith.constant 0 : index
    %c0_2 = arith.constant 0 : index
    %1 = vector.load %arg2[%c0_1, %c0_2] : memref<32x128xf32, #tpu.memory_space<vmem>>, vector<1x128xf32>
    %c1 = arith.constant 1 : index
    %c0_3 = arith.constant 0 : index
    %2 = vector.load %arg2[%c1, %c0_3] : memref<32x128xf32, #tpu.memory_space<vmem>>, vector<1x128xf32>
    %c8 = arith.constant 8 : index
    %c0_4 = arith.constant 0 : index
    %3 = vector.load %arg2[%c8, %c0_4] : memref<32x128xf32, #tpu.memory_space<vmem>>, vector<1x128xf32>
    %c9 = arith.constant 9 : index
    %c0_5 = arith.constant 0 : index
    %4 = vector.load %arg2[%c9, %c0_5] : memref<32x128xf32, #tpu.memory_space<vmem>>, vector<1x128xf32>
    %c10 = arith.constant 10 : index
    %c0_6 = arith.constant 0 : index
    %5 = vector.load %arg2[%c10, %c0_6] : memref<32x128xf32, #tpu.memory_space<vmem>>, vector<1x128xf32>
    %c16 = arith.constant 16 : index
    %c0_7 = arith.constant 0 : index
    %6 = vector.load %arg2[%c16, %c0_7] : memref<32x128xf32, #tpu.memory_space<vmem>>, vector<1x128xf32>
    %c17 = arith.constant 17 : index
    %c0_8 = arith.constant 0 : index
    %7 = vector.load %arg2[%c17, %c0_8] : memref<32x128xf32, #tpu.memory_space<vmem>>, vector<1x128xf32>
    %c24 = arith.constant 24 : index
    %c0_9 = arith.constant 0 : index
    %8 = vector.load %arg2[%c24, %c0_9] : memref<32x128xf32, #tpu.memory_space<vmem>>, vector<1x128xf32>
    %c25 = arith.constant 25 : index
    %c0_10 = arith.constant 0 : index
    %9 = vector.load %arg2[%c25, %c0_10] : memref<32x128xf32, #tpu.memory_space<vmem>>, vector<1x128xf32>
    %c26 = arith.constant 26 : index
    %c0_11 = arith.constant 0 : index
    %10 = vector.load %arg2[%c26, %c0_11] : memref<32x128xf32, #tpu.memory_space<vmem>>, vector<1x128xf32>
    %c27 = arith.constant 27 : index
    %c0_12 = arith.constant 0 : index
    %11 = vector.load %arg2[%c27, %c0_12] : memref<32x128xf32, #tpu.memory_space<vmem>>, vector<1x128xf32>
    %c28 = arith.constant 28 : index
    %c0_13 = arith.constant 0 : index
    %12 = vector.load %arg2[%c28, %c0_13] : memref<32x128xf32, #tpu.memory_space<vmem>>, vector<1x128xf32>
    %c29 = arith.constant 29 : index
    %c0_14 = arith.constant 0 : index
    %13 = vector.load %arg2[%c29, %c0_14] : memref<32x128xf32, #tpu.memory_space<vmem>>, vector<1x128xf32>
    %c30 = arith.constant 30 : index
    %c0_15 = arith.constant 0 : index
    %14 = vector.load %arg2[%c30, %c0_15] : memref<32x128xf32, #tpu.memory_space<vmem>>, vector<1x128xf32>
    %15 = vector.extract_strided_slice %0 {offsets = [0, 0], sizes = [8, 1], strides = [1, 1]} : vector<8x2xf32> to vector<8x1xf32>
    %16 = vector.broadcast %15 : vector<8x1xf32> to vector<8x128xf32>
    %17 = vector.broadcast %1 : vector<1x128xf32> to vector<8x128xf32>
    %18 = arith.mulf %16, %17 : vector<8x128xf32>
    %19 = vector.extract_strided_slice %0 {offsets = [0, 1], sizes = [8, 1], strides = [1, 1]} : vector<8x2xf32> to vector<8x1xf32>
    %20 = vector.broadcast %19 : vector<8x1xf32> to vector<8x128xf32>
    %21 = vector.broadcast %2 : vector<1x128xf32> to vector<8x128xf32>
    %22 = arith.mulf %20, %21 : vector<8x128xf32>
    %23 = arith.addf %18, %22 : vector<8x128xf32>
    %24 = vector.broadcast %8 : vector<1x128xf32> to vector<8x128xf32>
    %25 = arith.addf %23, %24 : vector<8x128xf32>
    %cst = arith.constant dense<0.000000e+00> : vector<128xf32>
    %26 = vector.multi_reduction <add>, %25, %cst [0] : vector<8x128xf32> to vector<128xf32>
    %27 = vector.shape_cast %26 : vector<128xf32> to vector<1x128xf32>
    %28 = arith.mulf %25, %25 : vector<8x128xf32>
    %cst_16 = arith.constant dense<0.000000e+00> : vector<128xf32>
    %29 = vector.multi_reduction <add>, %28, %cst_16 [0] : vector<8x128xf32> to vector<128xf32>
    %30 = vector.shape_cast %29 : vector<128xf32> to vector<1x128xf32>
    %cst_17 = arith.constant 1.250000e-01 : f32
    %31 = vector.broadcast %cst_17 : f32 to vector<1x128xf32>
    %32 = arith.mulf %27, %31 : vector<1x128xf32>
    %cst_18 = arith.constant 1.250000e-01 : f32
    %33 = vector.broadcast %cst_18 : f32 to vector<1x128xf32>
    %34 = arith.mulf %30, %33 : vector<1x128xf32>
    %35 = arith.mulf %32, %32 : vector<1x128xf32>
    %36 = arith.subf %34, %35 : vector<1x128xf32>
    %37 = vector.broadcast %32 : vector<1x128xf32> to vector<8x128xf32>
    %38 = arith.subf %25, %37 : vector<8x128xf32>
    %cst_19 = arith.constant 9.99999974E-6 : f32
    %39 = vector.broadcast %cst_19 : f32 to vector<1x128xf32>
    %40 = arith.addf %36, %39 : vector<1x128xf32>
    %41 = math.rsqrt %40 : vector<1x128xf32>
    %42 = vector.broadcast %41 : vector<1x128xf32> to vector<8x128xf32>
    %43 = arith.mulf %38, %42 : vector<8x128xf32>
    %44 = vector.broadcast %9 : vector<1x128xf32> to vector<8x128xf32>
    %45 = arith.mulf %43, %44 : vector<8x128xf32>
    %46 = vector.broadcast %10 : vector<1x128xf32> to vector<8x128xf32>
    %47 = arith.addf %45, %46 : vector<8x128xf32>
    %cst_20 = arith.constant 0.000000e+00 : f32
    %48 = vector.broadcast %cst_20 : f32 to vector<8x128xf32>
    %49 = arith.maximumf %47, %48 : vector<8x128xf32>
    %50 = vector.extract_strided_slice %49 {offsets = [0, 0], sizes = [8, 1], strides = [1, 1]} : vector<8x128xf32> to vector<8x1xf32>
    %51 = vector.broadcast %50 : vector<8x1xf32> to vector<8x128xf32>
    %52 = vector.broadcast %3 : vector<1x128xf32> to vector<8x128xf32>
    %53 = arith.mulf %51, %52 : vector<8x128xf32>
    %54 = vector.extract_strided_slice %49 {offsets = [0, 1], sizes = [8, 1], strides = [1, 1]} : vector<8x128xf32> to vector<8x1xf32>
    %55 = vector.broadcast %54 : vector<8x1xf32> to vector<8x128xf32>
    %56 = vector.broadcast %4 : vector<1x128xf32> to vector<8x128xf32>
    %57 = arith.mulf %55, %56 : vector<8x128xf32>
    %58 = arith.addf %53, %57 : vector<8x128xf32>
    %59 = vector.extract_strided_slice %49 {offsets = [0, 2], sizes = [8, 1], strides = [1, 1]} : vector<8x128xf32> to vector<8x1xf32>
    %60 = vector.broadcast %59 : vector<8x1xf32> to vector<8x128xf32>
    %61 = vector.broadcast %5 : vector<1x128xf32> to vector<8x128xf32>
    %62 = arith.mulf %60, %61 : vector<8x128xf32>
    %63 = arith.addf %58, %62 : vector<8x128xf32>
    %64 = vector.broadcast %11 : vector<1x128xf32> to vector<8x128xf32>
    %65 = arith.addf %63, %64 : vector<8x128xf32>
    %cst_21 = arith.constant dense<0.000000e+00> : vector<128xf32>
    %66 = vector.multi_reduction <add>, %65, %cst_21 [0] : vector<8x128xf32> to vector<128xf32>
    %67 = vector.shape_cast %66 : vector<128xf32> to vector<1x128xf32>
    %68 = arith.mulf %65, %65 : vector<8x128xf32>
    %cst_22 = arith.constant dense<0.000000e+00> : vector<128xf32>
    %69 = vector.multi_reduction <add>, %68, %cst_22 [0] : vector<8x128xf32> to vector<128xf32>
    %70 = vector.shape_cast %69 : vector<128xf32> to vector<1x128xf32>
    %cst_23 = arith.constant 1.250000e-01 : f32
    %71 = vector.broadcast %cst_23 : f32 to vector<1x128xf32>
    %72 = arith.mulf %67, %71 : vector<1x128xf32>
    %cst_24 = arith.constant 1.250000e-01 : f32
    %73 = vector.broadcast %cst_24 : f32 to vector<1x128xf32>
    %74 = arith.mulf %70, %73 : vector<1x128xf32>
    %75 = arith.mulf %72, %72 : vector<1x128xf32>
    %76 = arith.subf %74, %75 : vector<1x128xf32>
    %77 = vector.broadcast %72 : vector<1x128xf32> to vector<8x128xf32>
    %78 = arith.subf %65, %77 : vector<8x128xf32>
    %cst_25 = arith.constant 9.99999974E-6 : f32
    %79 = vector.broadcast %cst_25 : f32 to vector<1x128xf32>
    %80 = arith.addf %76, %79 : vector<1x128xf32>
    %81 = math.rsqrt %80 : vector<1x128xf32>
    %82 = vector.broadcast %81 : vector<1x128xf32> to vector<8x128xf32>
    %83 = arith.mulf %78, %82 : vector<8x128xf32>
    %84 = vector.broadcast %12 : vector<1x128xf32> to vector<8x128xf32>
    %85 = arith.mulf %83, %84 : vector<8x128xf32>
    %86 = vector.broadcast %13 : vector<1x128xf32> to vector<8x128xf32>
    %87 = arith.addf %85, %86 : vector<8x128xf32>
    %cst_26 = arith.constant 0.000000e+00 : f32
    %88 = vector.broadcast %cst_26 : f32 to vector<8x128xf32>
    %89 = arith.maximumf %87, %88 : vector<8x128xf32>
    %90 = vector.extract_strided_slice %89 {offsets = [0, 0], sizes = [8, 1], strides = [1, 1]} : vector<8x128xf32> to vector<8x1xf32>
    %91 = vector.broadcast %90 : vector<8x1xf32> to vector<8x128xf32>
    %92 = vector.broadcast %6 : vector<1x128xf32> to vector<8x128xf32>
    %93 = arith.mulf %91, %92 : vector<8x128xf32>
    %94 = vector.extract_strided_slice %89 {offsets = [0, 1], sizes = [8, 1], strides = [1, 1]} : vector<8x128xf32> to vector<8x1xf32>
    %95 = vector.broadcast %94 : vector<8x1xf32> to vector<8x128xf32>
    %96 = vector.broadcast %7 : vector<1x128xf32> to vector<8x128xf32>
    %97 = arith.mulf %95, %96 : vector<8x128xf32>
    %98 = arith.addf %93, %97 : vector<8x128xf32>
    %99 = vector.broadcast %14 : vector<1x128xf32> to vector<8x128xf32>
    %100 = arith.addf %98, %99 : vector<8x128xf32>
    %cst_27 = arith.constant dense<0xFF800000> : vector<8xf32>
    %101 = vector.multi_reduction <maximumf>, %100, %cst_27 [1] : vector<8x128xf32> to vector<8xf32>
    %102 = vector.shape_cast %101 : vector<8xf32> to vector<8x1xf32>
    %103 = vector.broadcast %102 : vector<8x1xf32> to vector<8x128xf32>
    %104 = arith.subf %100, %103 : vector<8x128xf32>
    %105 = math.exp %104 : vector<8x128xf32>
    %cst_28 = arith.constant dense<0.000000e+00> : vector<8xf32>
    %106 = vector.multi_reduction <add>, %105, %cst_28 [1] : vector<8x128xf32> to vector<8xf32>
    %107 = vector.shape_cast %106 : vector<8xf32> to vector<8x1xf32>
    %108 = math.log %107 : vector<8x1xf32>
    %109 = vector.broadcast %108 : vector<8x1xf32> to vector<8x128xf32>
    %110 = arith.subf %104, %109 : vector<8x128xf32>
    %111 = tpu.reciprocal %107 {approx = true} : vector<8x1xf32> -> vector<8x1xf32>
    %112 = vector.broadcast %111 : vector<8x1xf32> to vector<8x128xf32>
    %113 = arith.mulf %105, %112 : vector<8x128xf32>
    %114 = tpu.iota {dimensions = array<i32: 1>} : vector<8x128xi32>
    %c2_i32 = arith.constant 2 : i32
    %115 = vector.broadcast %c2_i32 : i32 to vector<8x128xi32>
    %116 = arith.cmpi slt, %114, %115 : vector<8x128xi32>
    %cst_29 = arith.constant 0.000000e+00 : f32
    %117 = vector.broadcast %cst_29 : f32 to vector<8x128xf32>
    %118 = arith.select %116, %110, %117 : vector<8x128xi1>, vector<8x128xf32>
    %c2_i32_30 = arith.constant 2 : i32
    %119 = tpu.dynamic_rotate %89 by %c2_i32_30 dim 1 : vector<8x128xf32>, i32 -> vector<8x128xf32>
    %120 = arith.addf %118, %119 : vector<8x128xf32>
    %c4_i32 = arith.constant 4 : i32
    %121 = tpu.dynamic_rotate %113 by %c4_i32 dim 1 : vector<8x128xf32>, i32 -> vector<8x128xf32>
    %122 = arith.addf %120, %121 : vector<8x128xf32>
    %c0_31 = arith.constant 0 : index
    %c0_32 = arith.constant 0 : index
    %123 = vector.load %arg3[%c0_31, %c0_32] : memref<8x128xf32, #tpu.memory_space<vmem>>, vector<8x128xf32>
    tpu.vector_store %arg3[%c0_31, %c0_32], %122 {strides = array<i32>} : memref<8x128xf32, #tpu.memory_space<vmem>>, vector<8x128xf32>,
    return
  }
  func.func @transform_0(%arg0: i32) -> (i32, i32) {
    %c0_i32 = arith.constant 0 : i32
    %c0_i32_0 = arith.constant 0 : i32
    %c0_i32_1 = arith.constant 0 : i32
    return %c0_i32, %c0_i32_0 : i32, i32
  }
  func.func @transform_1(%arg0: i32) -> (i32, i32) {
    %c0_i32 = arith.constant 0 : i32
    %c0_i32_0 = arith.constant 0 : i32
    %c0_i32_1 = arith.constant 0 : i32
    return %c0_i32, %c0_i32_0 : i32, i32
  }
  func.func @transform_2(%arg0: i32) -> (i32, i32) {
    %c0_i32 = arith.constant 0 : i32
    %c0_i32_0 = arith.constant 0 : i32
    %c0_i32_1 = arith.constant 0 : i32
    return %c0_i32, %c0_i32_0 : i32, i32
  }
}

</mosaic_0001>

<llo_original>
// kernel: gaussian_net_forward.1
$region0: #{gaussian_net_forward.1}
  #allocation0 [shape = 'u32[]', space=smem, size = 0x4, offset = 0x4, fixed_abs, tag = 'smem constant byte address 0x4 - core index']
  #allocation1 [shape = 'u32[144,128]{1,0:T(1,128)}', space=vmem, size = 0x12000, scoped, tag = 'internal scratch']
  %s0 = inlined_call_operand.vmem [shape: f32[8,2], index: 0, kind: input, shape index: {}]
  %s1 = inlined_call_operand.hbm [shape: f32[32,128], index: 1, kind: input, shape index: {}]
  %s2 = inlined_call_operand.vmem [shape: f32[8,128], index: 2, kind: output, shape index: {}]
  %s3 = sld [smem:[#allocation0]]
  $region22: #{gaussian_net_forward.1} parent=0
    _
  %s5 = ssub.s32 1, %s3
  %s6 = scalar_select 0, %s5, %s3
  $region1: #{gaussian_net_forward.1} parent=0
    #allocation2 [shape = 'u8[16384]{0}', space=vmem, size = 0x4000, scoped, tag = 'input window, operand 1, single buffered']
    #allocation3 [shape = 's32[1]{0}', space=sflag, size = 0x4, scoped, tag = 'scoped memory for gaussian_net_forward.1']
    %7 = vsyncpa [#allocation3], 0
    // Predicated region
    $region2: #{gaussian_net_forward.1} parent=1 // pred_check
      _
    $region3: #{gaussian_net_forward.1} parent=1 // pred_check_branch
      %9 = sbr.rel (0) target = $region5
    $region4: #{gaussian_net_forward.1} parent=1 // pred_region
      _
    $region5: #{gaussian_net_forward.1} parent=1 // pred_fallthru
      _
    // Predicated region
    $region6: #{gaussian_net_forward.1} parent=1 // pred_check
      _
    $region7: #{gaussian_net_forward.1} parent=1 // pred_check_branch
      %11 = sbr.rel (0) target = $region9
    $region8: #{gaussian_net_forward.1} parent=1 // pred_region
      %s13 = ssub.s32 512, 512
      %14 = vsyncadd [#allocation3], %s13
      %s15 = sshll.u32 [#allocation2], 4
      %s16 = int_to_ptr.vmem [resolvable:$true] %s15
      %21 = dma.hbm_to_vmem [thread:$0]  %s1, 512, %s16, [#allocation3], 128, 128, 8
    $region9: #{gaussian_net_forward.1} parent=1 // pred_fallthru
      _
    // Predicated region
    $region10: #{gaussian_net_forward.1} parent=1 // pred_check
      _
    $region11: #{gaussian_net_forward.1} parent=1 // pred_check_branch
      %23 = sbr.rel (0) target = $region13
    $region12: #{gaussian_net_forward.1} parent=1 // pred_region
      %24 = dma.done [#allocation3], 512
    $region13: #{gaussian_net_forward.1} parent=1 // pred_fallthru
      _
    %v25 = vld [vmem:[%s0] sm:$0xff]
    %v26 = vld [vmem:[#allocation2] sm:$0x1]
    %v27 = vld [vmem:[#allocation2 + $0x1] sm:$0x1]
    %v28 = vld [vmem:[#allocation2 + $0x8] sm:$0x1]
    %v29 = vld [vmem:[#allocation2 + $0x9] sm:$0x1]
    %v30 = vld [vmem:[#allocation2 + $0xa] sm:$0x1]
    %v31 = vld [vmem:[#allocation2 + $0x10] sm:$0x1]
    %v32 = vld [vmem:[#allocation2 + $0x11] sm:$0x1]
    %v33 = vld [vmem:[#allocation2 + $0x18] sm:$0x1]
    %v34 = vld [vmem:[#allocation2 + $0x19] sm:$0x1]
    %v35 = vld [vmem:[#allocation2 + $0x1a] sm:$0x1]
    %v36 = vld [vmem:[#allocation2 + $0x1b] sm:$0x1]
    %v37 = vld [vmem:[#allocation2 + $0x1c] sm:$0x1]
    %v38 = vld [vmem:[#allocation2 + $0x1d] sm:$0x1]
    %v39 = vld [vmem:[#allocation2 + $0x1e] sm:$0x1]
    %41 = vset.pattern.permute.xlu0 0
    %42 = vperm.xlu0 %41, %v25
    %v43 = vpop.permute.xlu0 %42
    %v45 = vlaneseq
    %v46 = vshrl.u32 %v45, 7
    %v47 = vsub.s32 0, %v46
    %v48 = vrot.slane %v26, %v47
    %v49 = vmul.f32 %v43, %v48
    %50 = vset.pattern.permute.xlu0 1
    %51 = vperm.xlu0 %50, %v25
    %v52 = vpop.permute.xlu0 %51
    %v54 = vlaneseq
    %v55 = vshrl.u32 %v54, 7
    %v56 = vsub.s32 0, %v55
    %v57 = vrot.slane %v27, %v56
    %v58 = vmul.f32 %v52, %v57
    %v59 = vadd.f32 %v49, %v58
    %v60 = vlaneseq
    %v61 = vshrl.u32 %v60, 7
    %v62 = vsub.s32 0, %v61
    %v63 = vrot.slane %v33, %v62
    %v64 = vadd.f32 %v59, %v63
    %v65 = vrot.slane %v64, 4
    %v66 = vadd.f32 %v64, %v65
    %v67 = vrot.slane %v66, 2
    %v68 = vadd.f32 %v66, %v67
    %v69 = vrot.slane %v68, 1
    %v70 = vadd.f32 %v68, %v69
    %v71 = vmul.f32 %v64, %v64
    %v72 = vrot.slane %v71, 4
    %v73 = vadd.f32 %v71, %v72
    %v74 = vrot.slane %v73, 2
    %v75 = vadd.f32 %v73, %v74
    %v76 = vrot.slane %v75, 1
    %v77 = vadd.f32 %v75, %v76
    %v78 = vmul.f32 %v70, 0.125
    %v79 = vmul.f32 %v77, 0.125
    %v80 = vmul.f32 %v78, %v78
    %v81 = vsub.f32 %v79, %v80
    %v82 = vsub.f32 %v64, %v78
    %v83 = vadd.f32 %v81, 1e-05
    %v84 = vrsqrt.pop %v83
    %v85 = vmul.f32 %v82, %v84
    %v86 = vlaneseq
    %v87 = vshrl.u32 %v86, 7
    %v88 = vsub.s32 0, %v87
    %v89 = vrot.slane %v34, %v88
    %v90 = vmul.f32 %v85, %v89
    %v91 = vlaneseq
    %v92 = vshrl.u32 %v91, 7
    %v93 = vsub.s32 0, %v92
    %v94 = vrot.slane %v35, %v93
    %v95 = vadd.f32 %v90, %v94
    %v96 = vmax.f32 %v95, 0.0
    %98 = vset.pattern.permute.xlu0 0
    %99 = vperm.xlu0 %98, %v96
    %v100 = vpop.permute.xlu0 %99
    %v102 = vlaneseq
    %v103 = vshrl.u32 %v102, 7
    %v104 = vsub.s32 0, %v103
    %v105 = vrot.slane %v28, %v104
    %v106 = vmul.f32 %v100, %v105
    %107 = vset.pattern.permute.xlu0 1
    %108 = vperm.xlu0 %107, %v96
    %v109 = vpop.permute.xlu0 %108
    %v111 = vlaneseq
    %v112 = vshrl.u32 %v111, 7
    %v113 = vsub.s32 0, %v112
    %v114 = vrot.slane %v29, %v113
    %v115 = vmul.f32 %v109, %v114
    %v116 = vadd.f32 %v106, %v115
    %117 = vset.pattern.permute.xlu0 2
    %118 = vperm.xlu0 %117, %v96
    %v119 = vpop.permute.xlu0 %118
    %v121 = vlaneseq
    %v122 = vshrl.u32 %v121, 7
    %v123 = vsub.s32 0, %v122
    %v124 = vrot.slane %v30, %v123
    %v125 = vmul.f32 %v119, %v124
    %v126 = vadd.f32 %v116, %v125
    %v127 = vlaneseq
    %v128 = vshrl.u32 %v127, 7
    %v129 = vsub.s32 0, %v128
    %v130 = vrot.slane %v36, %v129
    %v131 = vadd.f32 %v126, %v130
    %v132 = vrot.slane %v131, 4
    %v133 = vadd.f32 %v131, %v132
    %v134 = vrot.slane %v133, 2
    %v135 = vadd.f32 %v133, %v134
    %v136 = vrot.slane %v135, 1
    %v137 = vadd.f32 %v135, %v136
    %v138 = vmul.f32 %v131, %v131
    %v139 = vrot.slane %v138, 4
    %v140 = vadd.f32 %v138, %v139
    %v141 = vrot.slane %v140, 2
    %v142 = vadd.f32 %v140, %v141
    %v143 = vrot.slane %v142, 1
    %v144 = vadd.f32 %v142, %v143
    %v145 = vmul.f32 %v137, 0.125
    %v146 = vmul.f32 %v144, 0.125
    %v147 = vmul.f32 %v145, %v145
    %v148 = vsub.f32 %v146, %v147
    %v149 = vsub.f32 %v131, %v145
    %v150 = vadd.f32 %v148, 1e-05
    %v151 = vrsqrt.pop %v150
    %v152 = vmul.f32 %v149, %v151
    %v153 = vlaneseq
    %v154 = vshrl.u32 %v153, 7
    %v155 = vsub.s32 0, %v154
    %v156 = vrot.slane %v37, %v155
    %v157 = vmul.f32 %v152, %v156
    %v158 = vlaneseq
    %v159 = vshrl.u32 %v158, 7
    %v160 = vsub.s32 0, %v159
    %v161 = vrot.slane %v38, %v160
    %v162 = vadd.f32 %v157, %v161
    %v163 = vmax.f32 %v162, 0.0
    %165 = vset.pattern.permute.xlu0 0
    %166 = vperm.xlu0 %165, %v163
    %v167 = vpop.permute.xlu0 %166
    %v169 = vlaneseq
    %v170 = vshrl.u32 %v169, 7
    %v171 = vsub.s32 0, %v170
    %v172 = vrot.slane %v31, %v171
    %v173 = vmul.f32 %v167, %v172
    %174 = vset.pattern.permute.xlu0 1
    %175 = vperm.xlu0 %174, %v163
    %v176 = vpop.permute.xlu0 %175
    %v178 = vlaneseq
    %v179 = vshrl.u32 %v178, 7
    %v180 = vsub.s32 0, %v179
    %v181 = vrot.slane %v32, %v180
    %v182 = vmul.f32 %v176, %v181
    %v183 = vadd.f32 %v173, %v182
    %v184 = vlaneseq
    %v185 = vshrl.u32 %v184, 7
    %v186 = vsub.s32 0, %v185
    %v187 = vrot.slane %v39, %v186
    %v188 = vadd.f32 %v183, %v187
    %189 = vmax.xlane.f32.xlu0 %v188
    %v190 = vpop.xlane.xlu0 %189
    %v191 = vsub.f32 %v188, %v190
    %v192 = vmul.f32 %v191, 1.442695
    %v193 = vpow.pop %v192
    %194 = vadd.xlane.f32.xlu0 %v193
    %v195 = vpop.xlane.xlu0 %194
    %v196 = vlog2.pop %v195
    %v197 = vmul.f32 %v196, 0.6931472
    %v198 = vsub.f32 %v191, %v197
    %v199 = vrcp.pop %v195
    %v200 = vmul.f32 %v193, %v199
    %v201 = vlaneseq
    %v202 = vand.u32 %v201, 127
    %vm203 = vcmp.lt.s32.totalorder %v202, 2
    %v204 = vsel %vm203, %v198, 0.0
    %205 = vrot.lane.b32.xlu0 %v163, 2
    %v206 = vpop.permute.xlu0 %205
    %v207 = vadd.f32 %v204, %v206
    %208 = vrot.lane.b32.xlu0 %v200, 4
    %v209 = vpop.permute.xlu0 %208
    %v210 = vadd.f32 %v207, %v209
    %211 = vst [vmem:[%s2] sm:$0xff] %v210
    // Predicated region
    $region14: #{gaussian_net_forward.1} parent=1 // pred_check
      _
    $region15: #{gaussian_net_forward.1} parent=1 // pred_check_branch
      %213 = sbr.rel (0) target = $region17
    $region16: #{gaussian_net_forward.1} parent=1 // pred_region
      _
    $region17: #{gaussian_net_forward.1} parent=1 // pred_fallthru
      _
    // Predicated region
    $region18: #{gaussian_net_forward.1} parent=1 // pred_check
      _
    $region19: #{gaussian_net_forward.1} parent=1 // pred_check_branch
      %215 = sbr.rel (0) target = $region21
    $region20: #{gaussian_net_forward.1} parent=1 // pred_region
      _
    $region21: #{gaussian_net_forward.1} parent=1 // pred_fallthru
      _
    %216 = vsyncpa [#allocation3], 1

</llo_original>
